<compile_context>
chip_gen: v7x
topology: tpu7x:2x2x1
jax: 0.10.0
libtpu: 0.0.40
codegen_flags: <defaults>
</compile_context>

<pallas_src>
import math

import jax
import jax.numpy as jnp
from jax import lax
from jax.experimental import pallas as pl
from jax.experimental.pallas import tpu as pltpu


_LANE = 128
_SUBLANE = 8
_FAST_PATH_ELEMS = 128 * 1024      # below this, XLA's fused reduce wins
_MAX_LANE_CHUNKS = 64              # cap on unrolled lane-chunk adds (2-D path)


def _cdiv(a: int, b: int) -> int:
    return -(-a // b)


def _round_up(n: int, m: int) -> int:
    return _cdiv(n, m) * m


def _vmem_budget():
    """(in_tile_target_bytes, hard_cap_bytes, vmem_limit_bytes), generation-aware."""
    try:
        cap = pltpu.get_tpu_info().vmem_capacity_bytes
    except Exception:
        cap = 64 * 1024 * 1024                       # assume tightest (v7x-like)
    if cap >= 100 * 1024 * 1024:                     # v5e / v6e: 128 MiB VMEM
        return 20 * 1024 * 1024, 72 * 1024 * 1024, 96 * 1024 * 1024
    # v7x: 64 MiB VMEM per TensorCore
    return 10 * 1024 * 1024, 40 * 1024 * 1024, 48 * 1024 * 1024


def _tile_budget_elems(itemsize: int, in_tile_target: int, hard_cap: int) -> int:
    # Per input element: 2x itemsize (double-buffered input) + 4 bytes for the
    # accumulator-dtype temporary the compiler may materialize for cast/mask/sum.
    usable = hard_cap - 4 * 1024 * 1024
    per_elem = 2 * itemsize + 4
    return max(_SUBLANE * _SUBLANE * _LANE,
               min(in_tile_target // itemsize, usable // per_elem))


# ----------------------------------------------------------------------------
# Kernels
# ----------------------------------------------------------------------------

def _make_mid_axis_kernel(red: int, ts: int, use_scratch: bool):
    """Sum over axis 1 of a (TP, TS, TPOST) block; RED is grid axis 2."""
    needs_mask = (red % ts) != 0

    def kernel(x_ref, o_ref, *scratch):
        acc_ref = scratch[0] if use_scratch else o_ref
        k = pl.program_id(2)

        @pl.when(k == 0)
        def _():
            acc_ref[...] = jnp.zeros(acc_ref.shape, acc_ref.dtype)

        x = x_ref[...].astype(acc_ref.dtype)
        if needs_mask:
            row = k * ts + lax.broadcasted_iota(jnp.int32, (1, ts, 1), 1)
            x = jnp.where(row < red, x, 0)
        acc_ref[...] += jnp.sum(x, axis=1)

        if use_scratch:
            @pl.when(k == pl.num_programs(2) - 1)
            def _():
                o_ref[...] = acc_ref[...].astype(o_ref.dtype)

    return kernel


def _make_last_axis_kernel(red: int, tr: int):
    """Sum over the lane axis of a (TP, TR) block, TR % 128 == 0.

    Keeps a (TP, 128) lane-partial accumulator; one cross-lane reduce at the end.
    """
    needs_mask = (red % tr) != 0
    nchunk = tr // _LANE

    def kernel(x_ref, o_ref, acc_ref):
        k = pl.program_id(1)

        @pl.when(k == 0)
        def _():
            acc_ref[...] = jnp.zeros(acc_ref.shape, acc_ref.dtype)

        x = x_ref[...].astype(acc_ref.dtype)
        if needs_mask:
            col = k * tr + lax.broadcasted_iota(jnp.int32, (1, tr), 1)
            x = jnp.where(col < red, x, 0)

        partial = x[:, 0:_LANE]
        for c in range(1, nchunk):                      # static, lane-aligned slices
            partial = partial + x[:, c * _LANE:(c + 1) * _LANE]
        acc_ref[...] += partial

        @pl.when(k == pl.num_programs(1) - 1)
        def _():
            o_ref[...] = jnp.sum(acc_ref[...], axis=1,
                                 keepdims=True).astype(o_ref.dtype)

    return kernel


# ----------------------------------------------------------------------------
# Tile selection
# ----------------------------------------------------------------------------

def _choose_tiles_3d(pre, red, post, sub, budget_elems):
    post_pad_full = _round_up(post, _LANE)
    min_rows = sub * sub
    if post_pad_full * min_rows <= budget_elems:
        post_t, post_cost = post, post_pad_full        # full lane extent
    else:
        post_t = max(_LANE, (budget_elems // (min_rows * _LANE)) * _LANE)
        post_cost = post_t
    rows = max(min_rows, budget_elems // post_cost)
    ts = min(_round_up(red, sub), max(sub, ((rows // sub) // sub) * sub))
    tp = min(_round_up(pre, sub), max(sub, ((rows // ts) // sub) * sub))
    return tp, ts, post_t


def _choose_tiles_2d(pre, red, sub, budget_elems):
    tr_cap = min(_round_up(red, _LANE), _MAX_LANE_CHUNKS * _LANE)
    if tr_cap * sub <= budget_elems:
        tr = tr_cap
    else:
        tr = min(tr_cap, max(_LANE, (budget_elems // (sub * _LANE)) * _LANE))
    rows = max(sub, budget_elems // tr)
    tp = min(_round_up(pre, sub), max(sub, (rows // sub) * sub))
    return tp, tr


def _split_for_two_cores_3d(pre, post, tp, post_t, sub):
    """Ensure >= 2 blocks along the parallel axes (megacore sharding on v7x)."""
    if _cdiv(pre, tp) * _cdiv(post, post_t) >= 2:
        return tp, post_t
    if pre > sub:
        return min(tp, max(sub, _round_up(_cdiv(pre, 2), sub))), post_t
    if post > _LANE:
        return tp, min(post_t, max(_LANE, _round_up(_cdiv(post, 2), _LANE)))
    return tp, post_t


def _split_for_two_cores_2d(pre, tp, sub):
    if _cdiv(pre, tp) >= 2 or pre <= sub:
        return tp
    return min(tp, max(sub, _round_up(_cdiv(pre, 2), sub)))


# ----------------------------------------------------------------------------
# Drivers
# ----------------------------------------------------------------------------

def _acc_dtype_for(dtype):
    return jnp.float32 if jnp.issubdtype(dtype, jnp.floating) else jnp.int32


def _sum_middle_axis(x3: jax.Array) -> jax.Array:
    """Sum a (PRE, RED, POST) array over axis 1 (POST > 1)."""
    pre, red, post = x3.shape
    dtype = x3.dtype
    itemsize = jnp.dtype(dtype).itemsize
    acc_dtype = _acc_dtype_for(dtype)
    use_scratch = jnp.dtype(dtype) != jnp.dtype(acc_dtype)
    sub = max(_SUBLANE, 32 // itemsize)

    in_tile_target, hard_cap, vmem_limit = _vmem_budget()
    budget_elems = _tile_budget_elems(itemsize, in_tile_target, hard_cap)

    tp, ts, post_t = _choose_tiles_3d(pre, red, post, sub, budget_elems)
    tp, post_t = _split_for_two_cores_3d(pre, post, tp, post_t, sub)

    # Padding-aware VMEM footprint (double-buffered in/out, acc-dtype temp, acc).
    in_elems = tp * _round_up(ts, sub) * _round_up(post_t, _LANE)
    out_bytes = _round_up(tp, sub) * _round_up(post_t, _LANE) * itemsize
    acc_bytes = (_round_up(tp, _SUBLANE) * _round_up(post_t, _LANE) * 4
                 if use_scratch else 0)
    if in_elems * (2 * itemsize + 4) + 2 * out_bytes + acc_bytes > hard_cap:
        return jnp.sum(x3, axis=1).astype(dtype)        # safety net only

    grid = (_cdiv(pre, tp), _cdiv(post, post_t), _cdiv(red, ts))
    kernel = _make_mid_axis_kernel(red, ts, use_scratch)
    scratch = [pltpu.VMEM((tp, post_t), acc_dtype)] if use_scratch else []

    return pl.pallas_call(
        kernel,
        out_shape=jax.ShapeDtypeStruct((pre, post), dtype),
        grid_spec=pltpu.PrefetchScalarGridSpec(
            num_scalar_prefetch=0,
            grid=grid,
            in_specs=[pl.BlockSpec((tp, ts, post_t), lambda i, j, k: (i, k, j))],
            out_specs=pl.BlockSpec((tp, post_t), lambda i, j, k: (i, j)),
            scratch_shapes=scratch,
        ),
        compiler_params=pltpu.CompilerParams(
            dimension_semantics=("parallel", "parallel", "arbitrary"),
            vmem_limit_bytes=vmem_limit,
        ),
        cost_estimate=pl.CostEstimate(
            flops=pre * red * post,
            transcendentals=0,
            bytes_accessed=(pre * red * post + pre * post) * itemsize,
        ),
    )(x3)


def _sum_last_axis(x2: jax.Array) -> jax.Array:
    """Sum a (PRE, RED) array over axis 1 (dim == last axis of the input)."""
    pre, red = x2.shape
    dtype = x2.dtype
    itemsize = jnp.dtype(dtype).itemsize
    acc_dtype = _acc_dtype_for(dtype)
    sub = max(_SUBLANE, 32 // itemsize)

    in_tile_target, hard_cap, vmem_limit = _vmem_budget()
    budget_elems = _tile_budget_elems(itemsize, in_tile_target, hard_cap)

    tp, tr = _choose_tiles_2d(pre, red, sub, budget_elems)
    tp = _split_for_two_cores_2d(pre, tp, sub)

    in_elems = _round_up(tp, sub) * tr
    out_bytes = _round_up(tp, sub) * _LANE * itemsize
    acc_bytes = _round_up(tp, _SUBLANE) * _LANE * 4
    if in_elems * (2 * itemsize + 4) + 2 * out_bytes + acc_bytes > hard_cap:
        return jnp.sum(x2, axis=1).astype(dtype)         # safety net only

    grid = (_cdiv(pre, tp), _cdiv(red, tr))
    kernel = _make_last_axis_kernel(red, tr)

    out = pl.pallas_call(
        kernel,
        out_shape=jax.ShapeDtypeStruct((pre, 1), dtype),
        grid_spec=pltpu.PrefetchScalarGridSpec(
            num_scalar_prefetch=0,
            grid=grid,
            in_specs=[pl.BlockSpec((tp, tr), lambda i, k: (i, k))],
            out_specs=pl.BlockSpec((tp, 1), lambda i, k: (i, 0)),
            scratch_shapes=[pltpu.VMEM((tp, _LANE), acc_dtype)],
        ),
        compiler_params=pltpu.CompilerParams(
            dimension_semantics=("parallel", "arbitrary"),
            vmem_limit_bytes=vmem_limit,
        ),
        cost_estimate=pl.CostEstimate(
            flops=pre * red,
            transcendentals=0,
            bytes_accessed=(pre * red + pre) * itemsize,
        ),
    )(x2)
    return out[:, 0]


# ----------------------------------------------------------------------------
# Public API
# ----------------------------------------------------------------------------

def sum_pool(x: jax.Array, dim: int) -> jax.Array:
    """JAX/Pallas equivalent of SumPool(dim)(x) == x.sum(dim=dim)."""
    ndim = x.ndim
    if dim < 0:
        dim += ndim
    assert 0 <= dim < ndim, f"dim={dim} out of range for ndim={ndim}"

    shape = x.shape
    out_shape = shape[:dim] + shape[dim + 1:]
    pre = math.prod(shape[:dim])
    red = shape[dim]
    post = math.prod(shape[dim + 1:])

    # Fast paths: empty reduction axis, empty output, or tiny inputs where
    # Pallas launch/pipeline overhead dominates.
    if red == 0 or x.size <= _FAST_PATH_ELEMS:
        return jnp.sum(x, axis=dim).astype(x.dtype)

    if post == 1:
        out = _sum_last_axis(x.reshape(pre, red))
    else:
        out = _sum_middle_axis(x.reshape(pre, red, post))
    return out.reshape(out_shape)


class SumPool:
    """Drop-in analogue of the PyTorch module: sums over a specified dimension."""

    def __init__(self, dim: int):
        self.dim = dim

    def __call__(self, x: jax.Array) -> jax.Array:
        return sum_pool(x, self.dim)


if __name__ == "__main__":
    key = jax.random.PRNGKey(0)

    tests = [
        # (shape, dim, dtype)
        ((2, 4, 16, 16), 1, jnp.float32),    # tiny -> fast path
        ((2, 8, 32), 1, jnp.float32),        # tiny -> fast path
        ((8, 128, 256), 1, jnp.float32),     # 3-D kernel, middle axis
        ((8, 128, 256), 0, jnp.float32),     # 3-D kernel, leading axis (PRE == 1)
        ((8, 128, 256), -1, jnp.float32),    # lane-dense 2-D kernel, last axis
        ((4, 130, 384), 1, jnp.float32),     # ragged RED -> masked tail block
        ((6, 96, 520), -1, jnp.bfloat16),    # last axis, ragged, bf16 scratch path
    ]

    for shape, dim, dtype in tests:
        key, sub_key = jax.random.split(key)
        x = jax.random.normal(sub_key, shape, dtype=jnp.float32).astype(dtype)

        out = jax.block_until_ready(sum_pool(x, dim))
        ref = jnp.sum(x.astype(jnp.float32), axis=dim)

        assert out.shape == ref.shape, (shape, dim, out.shape, ref.shape)
        assert out.dtype == x.dtype, (shape, dim, out.dtype, x.dtype)
        if dtype == jnp.bfloat16:
            atol, rtol = 5e-1, 5e-2
        else:
            atol, rtol = 1e-3, 1e-4
        assert jnp.allclose(out.astype(jnp.float32), ref, atol=atol, rtol=rtol), \
            f"mismatch for {shape} dim={dim} dtype={dtype}"

    print("KERNEL_OK")
</pallas_src>

<mosaic_0001>
module attributes {stable_mosaic.version = 11 : i64} {
  func.func @kernel(%arg0: i32, %arg1: i32, %arg2: i32, %arg3: memref<8x128x128xf32, #tpu.memory_space<vmem>>, %arg4: memref<8x128xf32, #tpu.memory_space<vmem>>) attributes {dimension_semantics = [#tpu.dimension_semantics<parallel>, #tpu.dimension_semantics<parallel>, #tpu.dimension_semantics<arbitrary>], iteration_bounds = array<i64: 1, 2, 1>, scalar_prefetch = 0 : i64, scratch_operands = 0 : i64, tpu.core_type = #tpu.core_type<tc>, window_params = [{transform_indices = @transform_0, window_bounds = array<i64: 8, 128, 128>}, {transform_indices = @transform_1, window_bounds = array<i64: 8, 128>}]} {
    %c0_i32 = arith.constant 0 : i32
    %0 = arith.cmpi eq, %arg2, %c0_i32 : i32
    %1 = arith.extui %0 : i1 to i32
    %c0_i32_0 = arith.constant 0 : i32
    %2 = arith.cmpi ne, %1, %c0_i32_0 : i32
    scf.if %2 {
      %cst_7 = arith.constant 0.000000e+00 : f32
      %8 = vector.broadcast %cst_7 : f32 to vector<8x128xf32>
      %c0_8 = arith.constant 0 : index
      %c0_9 = arith.constant 0 : index
      %9 = vector.load %arg4[%c0_8, %c0_9] : memref<8x128xf32, #tpu.memory_space<vmem>>, vector<8x128xf32>
      tpu.vector_store %arg4[%c0_8, %c0_9], %8 {strides = array<i32>} : memref<8x128xf32, #tpu.memory_space<vmem>>, vector<8x128xf32>,
    } else {
    }
    %c0 = arith.constant 0 : index
    %c0_1 = arith.constant 0 : index
    %c0_2 = arith.constant 0 : index
    %3 = vector.load %arg3[%c0, %c0_1, %c0_2] : memref<8x128x128xf32, #tpu.memory_space<vmem>>, vector<8x128x128xf32>
    %c0_3 = arith.constant 0 : index
    %c0_4 = arith.constant 0 : index
    %4 = vector.load %arg4[%c0_3, %c0_4] : memref<8x128xf32, #tpu.memory_space<vmem>>, vector<8x128xf32>
    %cst = arith.constant dense<0.000000e+00> : vector<8x128xf32>
    %5 = vector.multi_reduction <add>, %3, %cst [1] : vector<8x128x128xf32> to vector<8x128xf32>
    %6 = arith.addf %4, %5 : vector<8x128xf32>
    %c0_5 = arith.constant 0 : index
    %c0_6 = arith.constant 0 : index
    %7 = vector.load %arg4[%c0_5, %c0_6] : memref<8x128xf32, #tpu.memory_space<vmem>>, vector<8x128xf32>
    tpu.vector_store %arg4[%c0_5, %c0_6], %6 {strides = array<i32>} : memref<8x128xf32, #tpu.memory_space<vmem>>, vector<8x128xf32>,
    return
  }
  func.func @transform_0(%arg0: i32, %arg1: i32, %arg2: i32) -> (i32, i32, i32) {
    %c0_i32 = arith.constant 0 : i32
    return %arg0, %arg2, %arg1 : i32, i32, i32
  }
  func.func @transform_1(%arg0: i32, %arg1: i32, %arg2: i32) -> (i32, i32) {
    %c0_i32 = arith.constant 0 : i32
    return %arg0, %arg1 : i32, i32
  }
}

</mosaic_0001>

<llo_original>
// kernel: tpu_custom_call.1
$region0: #{tpu_custom_call.1}
  #allocation0 [shape = 'u32[]', space=smem, size = 0x4, offset = 0x4, fixed_abs, tag = 'smem constant byte address 0x4 - core index']
  #allocation1 [shape = 'u32[144,128]{1,0:T(1,128)}', space=vmem, size = 0x12000, scoped, tag = 'internal scratch']
  %s0 = inlined_call_operand.hbm [shape: f32[8,128,256], index: 0, kind: input, shape index: {}]
  %s1 = inlined_call_operand.hbm [shape: f32[8,256], index: 1, kind: output, shape index: {}]
  %s2 = sld [smem:[#allocation0]]
  $region45: #{tpu_custom_call.1} parent=0
    _
  %s4 = ssub.s32 1, %s2
  %s5 = scalar_select 0, %s4, %s2
  $region1: #{tpu_custom_call.1} parent=0
    #allocation2 [shape = 'u8[1048576]{0}', space=vmem, size = 0x100000, scoped, tag = 'input window, operand 0']
    #allocation3 [shape = 's32[2]{0}', space=sflag, size = 0x8, scoped, tag = 'scoped memory for tpu_custom_call.1']
    #allocation4 [shape = 's32[2]{0}', space=sflag, size = 0x8, scoped, tag = 'scoped memory for tpu_custom_call.1']
    #allocation5 [shape = 'u8[8192]{0}', space=vmem, size = 0x2000, scoped, tag = 'output window, operand 0']
    %6 = vsyncpa [#allocation3], 0
    %s7 = scalar_lea.sflag [#allocation3], 1
    %8 = vsyncpa %s7, 0
    %9 = vsyncpa [#allocation4], 0
    %s10 = scalar_lea.sflag [#allocation4], 1
    %11 = vsyncpa %s10, 0
    loop: start=0, step=1, limit=4
    $region2: #{tpu_custom_call.1} parent=1 // loop_pre_header
      _
    $region3: #{tpu_custom_call.1} parent=1 // loop_header
      %s13 = sphi 0, %s17
      %p14 = scmp.ge.s32.totalorder %s13, 4
      %s20 = sphi 0, %s39
      %s21 = sphi 0, %s35
      %s22 = sphi 0, %s31
      %s23 = sphi 0, %s20
      %s24 = sphi 0, %s21
      %s25 = sphi 0, %s22
      %s26 = sphi 0, %s23
      %s27 = sphi 0, %s24
      %s28 = sphi 0, %s25
      %s46 = sphi 0, %s48
      %s49 = sphi 0, %s46
      %s50 = sphi 0, %s49
      %s66 = sphi 0, %s50
      %s74 = sphi 0, %s76
      %s77 = sphi 0, %s74
      %s78 = sphi 0, %s77
      %s94 = sphi 0, %s78
    $region4: #{tpu_custom_call.1} parent=1 // loop_header_branch
      %16 = sbr.rel (%p14) target = $region8
    $region5: #{tpu_custom_call.1} parent=1 // loop_body
      %s18 = ssub.s32 %s13, 1
      %s19 = ssub.s32 %s13, 2
      %s29 = sadd.s32 1, %s22
      %p30 = scmp.ge.s32.totalorder %s29, 1
      %s31 = scalar_select %p30, 0, %s29
      %s32 = sadd.s32 1, %s21
      %s33 = scalar_select %p30, %s32, %s21
      %p34 = scmp.ge.s32.totalorder %s33, 2
      %s35 = scalar_select %p34, 0, %s33
      %s36 = sadd.s32 1, %s20
      %s37 = scalar_select %p34, %s36, %s20
      %p38 = scmp.ge.s32.totalorder %s37, 1
      %s39 = scalar_select %p38, 0, %s37
      %s40 = ssub.s32 %s20, %s39
      %s41 = ssub.s32 %s22, %s31
      %s42 = sor.u32 %s40, %s41
      %s43 = ssub.s32 %s21, %s35
      %s44 = sor.u32 %s42, %s43
      %p45 = scmp.eq.s32.totalorder %s44, 0
      %s47 = sadd.s32 %s46, 1
      %s48 = scalar_select %p45, %s46, %s47
      %p51 = pneg %p45
      %p52 = scmp.eq.s32.totalorder %s13, 1
      %p53 = por %p51, %p52
      %p54 = scmp.ne.s32.totalorder %s46, %s49
      %p55 = scmp.eq.s32.totalorder %s13, 0
      %p56 = por %p54, %p55
      %p57 = scmp.ne.s32.totalorder %s46, %s49
      %p58 = scmp.eq.s32.totalorder %s18, 1
      %p59 = por %p57, %p58
      %p60 = scmp.ne.s32.totalorder %s49, %s50
      %p61 = scmp.eq.s32.totalorder %s18, 0
      %p62 = por %p60, %p61
      %p63 = scmp.ne.s32.totalorder %s49, %s50
      %p64 = scmp.eq.s32.totalorder %s19, 1
      %p65 = por %p63, %p64
      %p67 = scmp.ne.s32.totalorder %s50, %s66
      %p68 = scmp.eq.s32.totalorder %s19, 0
      %p69 = por %p67, %p68
      %s70 = ssub.s32 %s20, %s39
      %s71 = ssub.s32 %s21, %s35
      %s72 = sor.u32 %s70, %s71
      %p73 = scmp.eq.s32.totalorder %s72, 0
      %s75 = sadd.s32 %s74, 1
      %s76 = scalar_select %p73, %s74, %s75
      %p79 = pneg %p73
      %p80 = scmp.eq.s32.totalorder %s13, 1
      %p81 = por %p79, %p80
      %p82 = scmp.ne.s32.totalorder %s74, %s77
      %p83 = scmp.eq.s32.totalorder %s13, 0
      %p84 = por %p82, %p83
      %p85 = scmp.ne.s32.totalorder %s74, %s77
      %p86 = scmp.eq.s32.totalorder %s18, 1
      %p87 = por %p85, %p86
      %p88 = scmp.ne.s32.totalorder %s77, %s78
      %p89 = scmp.eq.s32.totalorder %s18, 0
      %p90 = por %p88, %p89
      %p91 = scmp.ne.s32.totalorder %s77, %s78
      %p92 = scmp.eq.s32.totalorder %s19, 1
      %p93 = por %p91, %p92
      %p95 = scmp.ne.s32.totalorder %s78, %s94
      %p96 = scmp.eq.s32.totalorder %s19, 0
      %p97 = por %p95, %p96
      %p98 = scmp.le.s32.totalorder 1, %s13
      %p99 = scmp.lt.s32.totalorder %s13, 3
      %p100 = pnand %p98, %p99
      %p101 = pneg %p100
      // Predicated region
      $region9: #{tpu_custom_call.1} parent=5 // pred_check
        _
      $region10: #{tpu_custom_call.1} parent=5 // pred_check_branch
        %103 = sbr.rel (%p100) target = $region12
      $region11: #{tpu_custom_call.1} parent=5 // pred_region
        %s104 = ssub.s32 %s13, 1
      $region12: #{tpu_custom_call.1} parent=5 // pred_fallthru
        _
      %p105 = scmp.lt.s32.totalorder %s13, 2
      // Predicated region
      $region13: #{tpu_custom_call.1} parent=5 // pred_check
        %p106 = pneg %p105
      $region14: #{tpu_custom_call.1} parent=5 // pred_check_branch
        %108 = sbr.rel (%p106) target = $region16
      $region15: #{tpu_custom_call.1} parent=5 // pred_region
        // Predicated region
        $region17: #{tpu_custom_call.1} parent=15 // pred_check
          %p109 = pneg %p56
        $region18: #{tpu_custom_call.1} parent=15 // pred_check_branch
          %111 = sbr.rel (%p109) target = $region20
        $region19: #{tpu_custom_call.1} parent=15 // pred_region
          %s112 = sand.u32 %s46, 1
          %s113 = scalar_lea.sflag [#allocation3], %s112
          %s114 = sand.u32 %s46, 1
          %s115 = smul.addr %s114, 1024
          %s116 = scalar_lea.vmem [#allocation2], %s115
          %s117 = smul.u32 8, %s20
          %s118 = smul.u32 16, %s22
          %s120 = ssub.s32 16384, 16384
          %121 = vsyncadd %s113, %s120
          %s122 = smul.addr %s118, 2
          %s123 = sadd.s32 %s21, %s122
          %s124 = smul.addr %s117, 32
          %s125 = sadd.s32 %s123, %s124
          %s126 = smul.addr %s125, 128
          %s127 = scalar_lea.hbm %s0, %s126
          %s128 = sshll.u32 %s116, 4
          %s129 = int_to_ptr.vmem [resolvable:$true] %s128
          %134 = dma.hbm_to_vmem [thread:$0]  %s127, 16384, %s129, %s113, 256, 128, 8
        $region20: #{tpu_custom_call.1} parent=15 // pred_fallthru
          _
      $region16: #{tpu_custom_call.1} parent=5 // pred_fallthru
        _
      %p135 = scmp.le.s32.totalorder 1, %s13
      %p136 = scmp.lt.s32.totalorder %s13, 3
      %p137 = pnand %p135, %p136
      %p138 = pneg %p137
      // Predicated region
      $region21: #{tpu_custom_call.1} parent=5 // pred_check
        _
      $region22: #{tpu_custom_call.1} parent=5 // pred_check_branch
        %140 = sbr.rel (%p137) target = $region24
      $region23: #{tpu_custom_call.1} parent=5 // pred_region
        %s141 = ssub.s32 %s13, 1
        %s142 = sand.u32 %s49, 1
        %s143 = scalar_lea.sflag [#allocation3], %s142
        %s144 = sand.u32 %s49, 1
        %s145 = smul.addr %s144, 1024
        %s146 = scalar_lea.vmem [#allocation2], %s145
        // Predicated region
        $region25: #{tpu_custom_call.1} parent=23 // pred_check
          %p147 = pneg %p62
        $region26: #{tpu_custom_call.1} parent=23 // pred_check_branch
          %149 = sbr.rel (%p147) target = $region28
        $region27: #{tpu_custom_call.1} parent=23 // pred_region
          %150 = dma.done %s143, 16384
        $region28: #{tpu_custom_call.1} parent=23 // pred_fallthru
          _
        %s151 = sand.u32 %s49, 1
        %s152 = scalar_lea.sflag [#allocation3], %s151
        %s153 = sand.u32 %s49, 1
        %s154 = smul.addr %s153, 1024
        %s155 = scalar_lea.vmem [#allocation2], %s154
        %p156 = pneg %p62
        %p157 = pneg %p59
        %p158 = pneg %p90
        %p159 = pneg %p87
        %s160 = sand.u32 %s77, 1
        %s161 = scalar_lea.sflag [#allocation4], %s160
        %s162 = sand.u32 %s77, 1
        %s163 = smul.addr %s162, 8
        %s164 = scalar_lea.vmem [#allocation5], %s163
        %s165 = smul.u32 8, %s23
        %s166 = smul.u32 16, %s25
        %p167 = scmp.eq.s32.totalorder %s25, 0
        // Predicated region
        $region29: #{tpu_custom_call.1} parent=23 // pred_check
          %p168 = pneg %p167
        $region30: #{tpu_custom_call.1} parent=23 // pred_check_branch
          %170 = sbr.rel (%p168) target = $region32
        $region31: #{tpu_custom_call.1} parent=23 // pred_region
          %171 = vst [vmem:[%s164] sm:$0xff] 0.0
        $region32: #{tpu_custom_call.1} parent=23 // pred_fallthru
          _
        %v172 = vld [vmem:[%s146] sm:$0xff]
        %v173 = vld [vmem:[%s146 + $0x8] sm:$0xff]
        %v174 = vld [vmem:[%s146 + $0x10] sm:$0xff]
        %v175 = vld [vmem:[%s146 + $0x18] sm:$0xff]
        %v176 = vld [vmem:[%s146 + $0x20] sm:$0xff]
        %v177 = vld [vmem:[%s146 + $0x28] sm:$0xff]
        %v178 = vld [vmem:[%s146 + $0x30] sm:$0xff]
        %v179 = vld [vmem:[%s146 + $0x38] sm:$0xff]
        %v180 = vld [vmem:[%s146 + $0x40] sm:$0xff]
        %v181 = vld [vmem:[%s146 + $0x48] sm:$0xff]
        %v182 = vld [vmem:[%s146 + $0x50] sm:$0xff]
        %v183 = vld [vmem:[%s146 + $0x58] sm:$0xff]
        %v184 = vld [vmem:[%s146 + $0x60] sm:$0xff]
        %v185 = vld [vmem:[%s146 + $0x68] sm:$0xff]
        %v186 = vld [vmem:[%s146 + $0x70] sm:$0xff]
        %v187 = vld [vmem:[%s146 + $0x78] sm:$0xff]
        %v188 = vld [vmem:[%s146 + $0x80] sm:$0xff]
        %v189 = vld [vmem:[%s146 + $0x88] sm:$0xff]
        %v190 = vld [vmem:[%s146 + $0x90] sm:$0xff]
        %v191 = vld [vmem:[%s146 + $0x98] sm:$0xff]
        %v192 = vld [vmem:[%s146 + $0xa0] sm:$0xff]
        %v193 = vld [vmem:[%s146 + $0xa8] sm:$0xff]
        %v194 = vld [vmem:[%s146 + $0xb0] sm:$0xff]
        %v195 = vld [vmem:[%s146 + $0xb8] sm:$0xff]
        %v196 = vld [vmem:[%s146 + $0xc0] sm:$0xff]
        %v197 = vld [vmem:[%s146 + $0xc8] sm:$0xff]
        %v198 = vld [vmem:[%s146 + $0xd0] sm:$0xff]
        %v199 = vld [vmem:[%s146 + $0xd8] sm:$0xff]
        %v200 = vld [vmem:[%s146 + $0xe0] sm:$0xff]
        %v201 = vld [vmem:[%s146 + $0xe8] sm:$0xff]
        %v202 = vld [vmem:[%s146 + $0xf0] sm:$0xff]
        %v203 = vld [vmem:[%s146 + $0xf8] sm:$0xff]
        %v204 = vld [vmem:[%s146 + $0x100] sm:$0xff]
        %v205 = vld [vmem:[%s146 + $0x108] sm:$0xff]
        %v206 = vld [vmem:[%s146 + $0x110] sm:$0xff]
        %v207 = vld [vmem:[%s146 + $0x118] sm:$0xff]
        %v208 = vld [vmem:[%s146 + $0x120] sm:$0xff]
        %v209 = vld [vmem:[%s146 + $0x128] sm:$0xff]
        %v210 = vld [vmem:[%s146 + $0x130] sm:$0xff]
        %v211 = vld [vmem:[%s146 + $0x138] sm:$0xff]
        %v212 = vld [vmem:[%s146 + $0x140] sm:$0xff]
        %v213 = vld [vmem:[%s146 + $0x148] sm:$0xff]
        %v214 = vld [vmem:[%s146 + $0x150] sm:$0xff]
        %v215 = vld [vmem:[%s146 + $0x158] sm:$0xff]
        %v216 = vld [vmem:[%s146 + $0x160] sm:$0xff]
        %v217 = vld [vmem:[%s146 + $0x168] sm:$0xff]
        %v218 = vld [vmem:[%s146 + $0x170] sm:$0xff]
        %v219 = vld [vmem:[%s146 + $0x178] sm:$0xff]
        %v220 = vld [vmem:[%s146 + $0x180] sm:$0xff]
        %v221 = vld [vmem:[%s146 + $0x188] sm:$0xff]
        %v222 = vld [vmem:[%s146 + $0x190] sm:$0xff]
        %v223 = vld [vmem:[%s146 + $0x198] sm:$0xff]
        %v224 = vld [vmem:[%s146 + $0x1a0] sm:$0xff]
        %v225 = vld [vmem:[%s146 + $0x1a8] sm:$0xff]
        %v226 = vld [vmem:[%s146 + $0x1b0] sm:$0xff]
        %v227 = vld [vmem:[%s146 + $0x1b8] sm:$0xff]
        %v228 = vld [vmem:[%s146 + $0x1c0] sm:$0xff]
        %v229 = vld [vmem:[%s146 + $0x1c8] sm:$0xff]
        %v230 = vld [vmem:[%s146 + $0x1d0] sm:$0xff]
        %v231 = vld [vmem:[%s146 + $0x1d8] sm:$0xff]
        %v232 = vld [vmem:[%s146 + $0x1e0] sm:$0xff]
        %v233 = vld [vmem:[%s146 + $0x1e8] sm:$0xff]
        %v234 = vld [vmem:[%s146 + $0x1f0] sm:$0xff]
        %v235 = vld [vmem:[%s146 + $0x1f8] sm:$0xff]
        %v236 = vld [vmem:[%s146 + $0x200] sm:$0xff]
        %v237 = vld [vmem:[%s146 + $0x208] sm:$0xff]
        %v238 = vld [vmem:[%s146 + $0x210] sm:$0xff]
        %v239 = vld [vmem:[%s146 + $0x218] sm:$0xff]
        %v240 = vld [vmem:[%s146 + $0x220] sm:$0xff]
        %v241 = vld [vmem:[%s146 + $0x228] sm:$0xff]
        %v242 = vld [vmem:[%s146 + $0x230] sm:$0xff]
        %v243 = vld [vmem:[%s146 + $0x238] sm:$0xff]
        %v244 = vld [vmem:[%s146 + $0x240] sm:$0xff]
        %v245 = vld [vmem:[%s146 + $0x248] sm:$0xff]
        %v246 = vld [vmem:[%s146 + $0x250] sm:$0xff]
        %v247 = vld [vmem:[%s146 + $0x258] sm:$0xff]
        %v248 = vld [vmem:[%s146 + $0x260] sm:$0xff]
        %v249 = vld [vmem:[%s146 + $0x268] sm:$0xff]
        %v250 = vld [vmem:[%s146 + $0x270] sm:$0xff]
        %v251 = vld [vmem:[%s146 + $0x278] sm:$0xff]
        %v252 = vld [vmem:[%s146 + $0x280] sm:$0xff]
        %v253 = vld [vmem:[%s146 + $0x288] sm:$0xff]
        %v254 = vld [vmem:[%s146 + $0x290] sm:$0xff]
        %v255 = vld [vmem:[%s146 + $0x298] sm:$0xff]
        %v256 = vld [vmem:[%s146 + $0x2a0] sm:$0xff]
        %v257 = vld [vmem:[%s146 + $0x2a8] sm:$0xff]
        %v258 = vld [vmem:[%s146 + $0x2b0] sm:$0xff]
        %v259 = vld [vmem:[%s146 + $0x2b8] sm:$0xff]
        %v260 = vld [vmem:[%s146 + $0x2c0] sm:$0xff]
        %v261 = vld [vmem:[%s146 + $0x2c8] sm:$0xff]
        %v262 = vld [vmem:[%s146 + $0x2d0] sm:$0xff]
        %v263 = vld [vmem:[%s146 + $0x2d8] sm:$0xff]
        %v264 = vld [vmem:[%s146 + $0x2e0] sm:$0xff]
        %v265 = vld [vmem:[%s146 + $0x2e8] sm:$0xff]
        %v266 = vld [vmem:[%s146 + $0x2f0] sm:$0xff]
        %v267 = vld [vmem:[%s146 + $0x2f8] sm:$0xff]
        %v268 = vld [vmem:[%s146 + $0x300] sm:$0xff]
        %v269 = vld [vmem:[%s146 + $0x308] sm:$0xff]
        %v270 = vld [vmem:[%s146 + $0x310] sm:$0xff]
        %v271 = vld [vmem:[%s146 + $0x318] sm:$0xff]
        %v272 = vld [vmem:[%s146 + $0x320] sm:$0xff]
        %v273 = vld [vmem:[%s146 + $0x328] sm:$0xff]
        %v274 = vld [vmem:[%s146 + $0x330] sm:$0xff]
        %v275 = vld [vmem:[%s146 + $0x338] sm:$0xff]
        %v276 = vld [vmem:[%s146 + $0x340] sm:$0xff]
        %v277 = vld [vmem:[%s146 + $0x348] sm:$0xff]
        %v278 = vld [vmem:[%s146 + $0x350] sm:$0xff]
        %v279 = vld [vmem:[%s146 + $0x358] sm:$0xff]
        %v280 = vld [vmem:[%s146 + $0x360] sm:$0xff]
        %v281 = vld [vmem:[%s146 + $0x368] sm:$0xff]
        %v282 = vld [vmem:[%s146 + $0x370] sm:$0xff]
        %v283 = vld [vmem:[%s146 + $0x378] sm:$0xff]
        %v284 = vld [vmem:[%s146 + $0x380] sm:$0xff]
        %v285 = vld [vmem:[%s146 + $0x388] sm:$0xff]
        %v286 = vld [vmem:[%s146 + $0x390] sm:$0xff]
        %v287 = vld [vmem:[%s146 + $0x398] sm:$0xff]
        %v288 = vld [vmem:[%s146 + $0x3a0] sm:$0xff]
        %v289 = vld [vmem:[%s146 + $0x3a8] sm:$0xff]
        %v290 = vld [vmem:[%s146 + $0x3b0] sm:$0xff]
        %v291 = vld [vmem:[%s146 + $0x3b8] sm:$0xff]
        %v292 = vld [vmem:[%s146 + $0x3c0] sm:$0xff]
        %v293 = vld [vmem:[%s146 + $0x3c8] sm:$0xff]
        %v294 = vld [vmem:[%s146 + $0x3d0] sm:$0xff]
        %v295 = vld [vmem:[%s146 + $0x3d8] sm:$0xff]
        %v296 = vld [vmem:[%s146 + $0x3e0] sm:$0xff]
        %v297 = vld [vmem:[%s146 + $0x3e8] sm:$0xff]
        %v298 = vld [vmem:[%s146 + $0x3f0] sm:$0xff]
        %v299 = vld [vmem:[%s146 + $0x3f8] sm:$0xff]
        %v300 = vld [vmem:[%s164] sm:$0xff]
        %v301 = vadd.f32 %v172, %v173
        %v302 = vadd.f32 %v301, %v174
        %v303 = vadd.f32 %v302, %v175
        %v304 = vadd.f32 %v303, %v176
        %v305 = vadd.f32 %v304, %v177
        %v306 = vadd.f32 %v305, %v178
        %v307 = vadd.f32 %v306, %v179
        %v308 = vadd.f32 %v307, %v180
        %v309 = vadd.f32 %v308, %v181
        %v310 = vadd.f32 %v309, %v182
        %v311 = vadd.f32 %v310, %v183
        %v312 = vadd.f32 %v311, %v184
        %v313 = vadd.f32 %v312, %v185
        %v314 = vadd.f32 %v313, %v186
        %v315 = vadd.f32 %v314, %v187
        %v316 = vrot.slane %v315, 4
        %v317 = vadd.f32 %v315, %v316
        %v318 = vrot.slane %v317, 2
        %v319 = vadd.f32 %v317, %v318
        %v320 = vrot.slane %v319, 1
        %v321 = vadd.f32 %v319, %v320
        %v322 = vadd.f32 %v188, %v189
        %v323 = vadd.f32 %v322, %v190
        %v324 = vadd.f32 %v323, %v191
        %v325 = vadd.f32 %v324, %v192
        %v326 = vadd.f32 %v325, %v193
        %v327 = vadd.f32 %v326, %v194
        %v328 = vadd.f32 %v327, %v195
        %v329 = vadd.f32 %v328, %v196
        %v330 = vadd.f32 %v329, %v197
        %v331 = vadd.f32 %v330, %v198
        %v332 = vadd.f32 %v331, %v199
        %v333 = vadd.f32 %v332, %v200
        %v334 = vadd.f32 %v333, %v201
        %v335 = vadd.f32 %v334, %v202
        %v336 = vadd.f32 %v335, %v203
        %v337 = vrot.slane %v336, 4
        %v338 = vadd.f32 %v336, %v337
        %v339 = vrot.slane %v338, 2
        %v340 = vadd.f32 %v338, %v339
        %v341 = vrot.slane %v340, 1
        %v342 = vadd.f32 %v340, %v341
        %v343 = vadd.f32 %v204, %v205
        %v344 = vadd.f32 %v343, %v206
        %v345 = vadd.f32 %v344, %v207
        %v346 = vadd.f32 %v345, %v208
        %v347 = vadd.f32 %v346, %v209
        %v348 = vadd.f32 %v347, %v210
        %v349 = vadd.f32 %v348, %v211
        %v350 = vadd.f32 %v349, %v212
        %v351 = vadd.f32 %v350, %v213
        %v352 = vadd.f32 %v351, %v214
        %v353 = vadd.f32 %v352, %v215
        %v354 = vadd.f32 %v353, %v216
        %v355 = vadd.f32 %v354, %v217
        %v356 = vadd.f32 %v355, %v218
        %v357 = vadd.f32 %v356, %v219
        %v358 = vrot.slane %v357, 4
        %v359 = vadd.f32 %v357, %v358
        %v360 = vrot.slane %v359, 2
        %v361 = vadd.f32 %v359, %v360
        %v362 = vrot.slane %v361, 1
        %v363 = vadd.f32 %v361, %v362
        %v364 = vadd.f32 %v220, %v221
        %v365 = vadd.f32 %v364, %v222
        %v366 = vadd.f32 %v365, %v223
        %v367 = vadd.f32 %v366, %v224
        %v368 = vadd.f32 %v367, %v225
        %v369 = vadd.f32 %v368, %v226
        %v370 = vadd.f32 %v369, %v227
        %v371 = vadd.f32 %v370, %v228
        %v372 = vadd.f32 %v371, %v229
        %v373 = vadd.f32 %v372, %v230
        %v374 = vadd.f32 %v373, %v231
        %v375 = vadd.f32 %v374, %v232
        %v376 = vadd.f32 %v375, %v233
        %v377 = vadd.f32 %v376, %v234
        %v378 = vadd.f32 %v377, %v235
        %v379 = vrot.slane %v378, 4
        %v380 = vadd.f32 %v378, %v379
        %v381 = vrot.slane %v380, 2
        %v382 = vadd.f32 %v380, %v381
        %v383 = vrot.slane %v382, 1
        %v384 = vadd.f32 %v382, %v383
        %v385 = vadd.f32 %v236, %v237
        %v386 = vadd.f32 %v385, %v238
        %v387 = vadd.f32 %v386, %v239
        %v388 = vadd.f32 %v387, %v240
        %v389 = vadd.f32 %v388, %v241
        %v390 = vadd.f32 %v389, %v242
        %v391 = vadd.f32 %v390, %v243
        %v392 = vadd.f32 %v391, %v244
        %v393 = vadd.f32 %v392, %v245
        %v394 = vadd.f32 %v393, %v246
        %v395 = vadd.f32 %v394, %v247
        %v396 = vadd.f32 %v395, %v248
        %v397 = vadd.f32 %v396, %v249
        %v398 = vadd.f32 %v397, %v250
        %v399 = vadd.f32 %v398, %v251
        %v400 = vrot.slane %v399, 4
        %v401 = vadd.f32 %v399, %v400
        %v402 = vrot.slane %v401, 2
        %v403 = vadd.f32 %v401, %v402
        %v404 = vrot.slane %v403, 1
        %v405 = vadd.f32 %v403, %v404
        %v406 = vadd.f32 %v252, %v253
        %v407 = vadd.f32 %v406, %v254
        %v408 = vadd.f32 %v407, %v255
        %v409 = vadd.f32 %v408, %v256
        %v410 = vadd.f32 %v409, %v257
        %v411 = vadd.f32 %v410, %v258
        %v412 = vadd.f32 %v411, %v259
        %v413 = vadd.f32 %v412, %v260
        %v414 = vadd.f32 %v413, %v261
        %v415 = vadd.f32 %v414, %v262
        %v416 = vadd.f32 %v415, %v263
        %v417 = vadd.f32 %v416, %v264
        %v418 = vadd.f32 %v417, %v265
        %v419 = vadd.f32 %v418, %v266
        %v420 = vadd.f32 %v419, %v267
        %v421 = vrot.slane %v420, 4
        %v422 = vadd.f32 %v420, %v421
        %v423 = vrot.slane %v422, 2
        %v424 = vadd.f32 %v422, %v423
        %v425 = vrot.slane %v424, 1
        %v426 = vadd.f32 %v424, %v425
        %v427 = vadd.f32 %v268, %v269
        %v428 = vadd.f32 %v427, %v270
        %v429 = vadd.f32 %v428, %v271
        %v430 = vadd.f32 %v429, %v272
        %v431 = vadd.f32 %v430, %v273
        %v432 = vadd.f32 %v431, %v274
        %v433 = vadd.f32 %v432, %v275
        %v434 = vadd.f32 %v433, %v276
        %v435 = vadd.f32 %v434, %v277
        %v436 = vadd.f32 %v435, %v278
        %v437 = vadd.f32 %v436, %v279
        %v438 = vadd.f32 %v437, %v280
        %v439 = vadd.f32 %v438, %v281
        %v440 = vadd.f32 %v439, %v282
        %v441 = vadd.f32 %v440, %v283
        %v442 = vrot.slane %v441, 4
        %v443 = vadd.f32 %v441, %v442
        %v444 = vrot.slane %v443, 2
        %v445 = vadd.f32 %v443, %v444
        %v446 = vrot.slane %v445, 1
        %v447 = vadd.f32 %v445, %v446
        %v448 = vadd.f32 %v284, %v285
        %v449 = vadd.f32 %v448, %v286
        %v450 = vadd.f32 %v449, %v287
        %v451 = vadd.f32 %v450, %v288
        %v452 = vadd.f32 %v451, %v289
        %v453 = vadd.f32 %v452, %v290
        %v454 = vadd.f32 %v453, %v291
        %v455 = vadd.f32 %v454, %v292
        %v456 = vadd.f32 %v455, %v293
        %v457 = vadd.f32 %v456, %v294
        %v458 = vadd.f32 %v457, %v295
        %v459 = vadd.f32 %v458, %v296
        %v460 = vadd.f32 %v459, %v297
        %v461 = vadd.f32 %v460, %v298
        %v462 = vadd.f32 %v461, %v299
        %v463 = vrot.slane %v462, 4
        %v464 = vadd.f32 %v462, %v463
        %v465 = vrot.slane %v464, 2
        %v466 = vadd.f32 %v464, %v465
        %v467 = vrot.slane %v466, 1
        %v468 = vadd.f32 %v466, %v467
        %vm477 = vcmask 1041409
        %v478 = vsel %vm477, %v342, %v321
        %vm479 = vcmask 1042434
        %v480 = vsel %vm479, %v363, %v478
        %vm481 = vcmask 1043459
        %v482 = vsel %vm481, %v384, %v480
        %vm483 = vcmask 1044484
        %v484 = vsel %vm483, %v405, %v482
        %vm485 = vcmask 1045509
        %v486 = vsel %vm485, %v426, %v484
        %vm487 = vcmask 1046534
        %v488 = vsel %vm487, %v447, %v486
        %vm489 = vcmask 1047559
        %v490 = vsel %vm489, %v468, %v488
        %v492 = vadd.f32 %v300, %v490
        %493 = vst [vmem:[%s164] sm:$0xff] %v492
        %s494 = sand.u32 %s77, 1
        %s495 = scalar_lea.sflag [#allocation4], %s494
        %s496 = sand.u32 %s77, 1
        %s497 = smul.addr %s496, 8
        %s498 = scalar_lea.vmem [#allocation5], %s497
        // Predicated region
        $region33: #{tpu_custom_call.1} parent=23 // pred_check
          %p499 = pneg %p87
        $region34: #{tpu_custom_call.1} parent=23 // pred_check_branch
          %501 = sbr.rel (%p499) target = $region36
        $region35: #{tpu_custom_call.1} parent=23 // pred_region
          %s503 = ssub.s32 128, 128
          %504 = vsyncadd %s495, %s503
          %s505 = smul.addr %s23, 2
          %s506 = sadd.s32 %s24, %s505
          %s507 = smul.addr %s506, 128
          %s508 = scalar_lea.hbm %s1, %s507
          %s510 = sshll.u32 %s498, 4
          %s511 = int_to_ptr.vmem [resolvable:$true] %s510
          %513 = dma.vmem_to_hbm [thread:$0]  %s511, 128, %s508, %s495
        $region36: #{tpu_custom_call.1} parent=23 // pred_fallthru
          _
      $region24: #{tpu_custom_call.1} parent=5 // pred_fallthru
        _
      %p514 = scmp.le.s32.totalorder 2, %s13
      // Predicated region
      $region37: #{tpu_custom_call.1} parent=5 // pred_check
        %p515 = pneg %p514
      $region38: #{tpu_custom_call.1} parent=5 // pred_check_branch
        %517 = sbr.rel (%p515) target = $region40
      $region39: #{tpu_custom_call.1} parent=5 // pred_region
        %s518 = ssub.s32 %s13, 2
        // Predicated region
        $region41: #{tpu_custom_call.1} parent=39 // pred_check
          %p519 = pneg %p93
        $region42: #{tpu_custom_call.1} parent=39 // pred_check_branch
          %521 = sbr.rel (%p519) target = $region44
        $region43: #{tpu_custom_call.1} parent=39 // pred_region
          %s522 = sand.u32 %s78, 1
          %s523 = scalar_lea.sflag [#allocation4], %s522
          %s524 = sand.u32 %s78, 1
          %s525 = smul.addr %s524, 8
          %s526 = scalar_lea.vmem [#allocation5], %s525
          %527 = dma.done %s523, 128
        $region44: #{tpu_custom_call.1} parent=39 // pred_fallthru
          _
      $region40: #{tpu_custom_call.1} parent=5 // pred_fallthru
        _
    $region6: #{tpu_custom_call.1} parent=1 // loop_footer
      %s17 = sadd.s32 1, %s13
    $region7: #{tpu_custom_call.1} parent=1 // loop_footer_branch
      %12 = sbr.rel target = $region3
    $region8: #{tpu_custom_call.1} parent=1 // loop_exit
      _
    %528 = vsyncpa [#allocation3], 1
    %s529 = scalar_lea.sflag [#allocation3], 1
    %530 = vsyncpa %s529, 1
    %531 = vsyncpa [#allocation4], 1
    %s532 = scalar_lea.sflag [#allocation4], 1
    %533 = vsyncpa %s532, 1

</llo_original>
